<compile_context>
chip_gen: v5e
topology: v5e:2x2
jax: 0.10.0
libtpu: 0.0.40
codegen_flags: <defaults>
</compile_context>

<pallas_src>
import functools

import jax
import jax.numpy as jnp
from jax.experimental import pallas as pl
from jax.experimental.pallas import tpu as pltpu


# ----------------------------- Pallas kernel -------------------------------
def _teacher_student_kernel(x_ref, w1_ref, b1_ref, w2_ref, b2_ref, *rest,
                            imgs_per_tile, patches_per_image, elt_dtype,
                            use_reshape_pool):
    """One (row-tile, branch) grid step of the fused student/teacher backbone.

    Grid = (row_tiles, 2).  Axis 0 tiles the B*P patch rows (streamed,
    double-buffered, megacore-parallel); axis 1 is the branch (0 = student,
    1 = teacher), innermost so every patches tile is fetched once and reused.

    x_ref  : (tile_rows, Din)   bf16  patch rows of this tile (shared block)
    w1_ref : (2, Din, D)        bf16  stacked patch-embed weights (resident)
    b1_ref : (2, 1, D)          elt   stacked patch-embed biases  (resident)
    w2_ref : (2, D, Dout_pad)   bf16  stacked head weights        (resident)
    b2_ref : (2, 1, Dout_pad)   f32   stacked head biases         (resident)
    pool_ref (optional): (imgs, tile_rows) elt  block-diagonal ones matrix
    out_ref: (imgs, Dout_pad)   f32   this tile's images, this branch
    """
    if use_reshape_pool:
        (out_ref,) = rest
        pool_ref = None
    else:
        pool_ref, out_ref = rest

    br = pl.program_id(1)                       # 0 = student, 1 = teacher
    w1 = w1_ref[br]                             # (Din, D)       bf16
    b1 = b1_ref[br]                             # (1, D)         elt
    w2 = w2_ref[br]                             # (D, Dout_pad)  bf16
    b2 = b2_ref[br]                             # (1, Dout_pad)  f32

    # Patch embedding on the MXU: bf16 operands, f32 accumulation.
    h = jnp.dot(x_ref[...], w1, preferred_element_type=jnp.float32)
    # Bias + GELU in the chip-appropriate elementwise dtype
    # (bf16 on v6e/v7x, f32 on v5e).  tanh GELU routes to the EUP slot.
    h = h.astype(elt_dtype) + b1
    h = jax.nn.gelu(h, approximate=True)

    d = h.shape[-1]
    inv_p = 1.0 / patches_per_image
    if use_reshape_pool:
        # P is sublane-aligned: reshape is a free view; sublane reduce on XLU,
        # accumulated in f32.
        h3 = h.reshape(imgs_per_tile, patches_per_image, d)
        pooled = jnp.sum(h3.astype(jnp.float32), axis=1) * inv_p
    else:
        # Awkward P: pool via a small resident block-diagonal ones matrix on
        # the MXU (which has slack - kernel is mem-bound), avoiding a hidden
        # relayout copy of the full h intermediate.
        pooled = jnp.dot(pool_ref[...], h,
                         preferred_element_type=jnp.float32) * inv_p

    # Head on the MXU: bf16 operands, f32 accumulation + f32 bias.
    out = jnp.dot(pooled.astype(jnp.bfloat16), w2,
                  preferred_element_type=jnp.float32)
    out_ref[...] = (out + b2).astype(out_ref.dtype)


# ------------------------------ Python glue --------------------------------
def _extract_patches(x, patch):
    """NCHW image -> (B*P, C*patch*patch) flattened non-overlapping patches.

    Matches Conv2d(kernel=stride=patch) patch embedding with its weight
    flattened in (C, ph, pw) order.
    """
    B, C, H, W = x.shape
    hp, wp = H // patch, W // patch
    x = x.reshape(B, C, hp, patch, wp, patch)
    x = x.transpose(0, 2, 4, 1, 3, 5)                 # (B, hp, wp, C, ph, pw)
    return x.reshape(B * hp * wp, C * patch * patch)


def _nbytes(a):
    return int(a.size) * a.dtype.itemsize


def _vmem_capacity_bytes():
    """Per-core VMEM capacity; conservative v7x fallback if the query fails."""
    try:
        return int(pltpu.get_tpu_info().vmem_capacity_bytes)
    except Exception:
        return 64 << 20


def _elementwise_dtype():
    """bf16 elementwise math on bf16-native VPU/EUP chips, else f32 (v5e)."""
    try:
        kind = jax.devices()[0].device_kind.lower()
    except Exception:
        kind = ""
    if any(tag in kind for tag in ("v6", "v7", "tpu7")):
        return jnp.bfloat16
    return jnp.float32


def _choose_imgs_per_tile(B, P, din, d, dout_pad, elt_bytes, vmem_capacity):
    """Largest whole-image row tile that fits the per-generation VMEM budget.

    tile_rows = imgs * P must (a) divide B*P (imgs divides B), (b) satisfy the
    (8,128) BlockSpec rule on both the patches and output blocks, and
    (c) keep 2x(patch tile) + f32 matmul result + elt temps + resident
    weights under ~45% of VMEM.  Rows are capped at 2048 (>=512-row tiles
    already reach ~85% of HBM roofline; more steps = better pipelining).
    """
    budget = int(0.45 * vmem_capacity)
    weight_bytes = 2 * (2 * din * d * 2 + 2 * d * dout_pad * 2
                        + 2 * d * elt_bytes + 2 * dout_pad * 4)
    per_row = 2 * din * 2 + d * (4 + 3 * elt_bytes)
    avail = budget - weight_bytes - (2 << 20)
    max_rows = max(P, avail // per_row) if avail > 0 else P
    target_rows = max(P, min(max_rows, 2048))

    divisors = [g for g in range(1, B + 1) if B % g == 0]
    valid = [g for g in divisors
             if (g % 8 == 0 or g == B) and ((g * P) % 8 == 0 or g == B)]
    fitting = [g for g in valid if g * P <= target_rows]
    # TODO(synk): if even the smallest aligned tile exceeds VMEM (huge P),
    # additionally tile the patch dimension inside an image.
    return max(fitting) if fitting else min(valid)


@functools.partial(jax.jit, static_argnames=("patch",))
def teacher_student_forward(x, student_params, teacher_params, patch=4):
    """Equivalent of TeacherStudent.forward: returns (output_s, output_t)."""
    B = x.shape[0]
    patches = _extract_patches(x, patch).astype(jnp.bfloat16)   # (B*P, Din)
    n_rows, din = patches.shape
    P = n_rows // B

    elt_dtype = _elementwise_dtype()
    elt_bytes = jnp.dtype(elt_dtype).itemsize

    # Stack student/teacher parameters along a leading branch axis; the whole
    # stacked arrays stay resident in VMEM (constant index_map), the branch is
    # selected inside the kernel.
    def stack(name, dtype):
        return jnp.stack([student_params[name], teacher_params[name]],
                         axis=0).astype(dtype)

    w1 = stack("w1", jnp.bfloat16)       # (2, Din, D)
    b1 = stack("b1", elt_dtype)          # (2, 1, D)
    w2 = stack("w2", jnp.bfloat16)       # (2, D, Dout)
    b2 = stack("b2", jnp.float32)        # (2, 1, Dout)

    d = w1.shape[-1]
    dout = w2.shape[-1]
    # Lane-dense head output: pad Dout to a multiple of 128, slice afterwards.
    dout_pad = -(-dout // 128) * 128
    if dout_pad != dout:
        w2 = jnp.pad(w2, ((0, 0), (0, 0), (0, dout_pad - dout)))
        b2 = jnp.pad(b2, ((0, 0), (0, 0), (0, dout_pad - dout)))

    vmem_capacity = _vmem_capacity_bytes()
    imgs = _choose_imgs_per_tile(B, P, din, d, dout_pad, elt_bytes,
                                 vmem_capacity)
    tile_rows = imgs * P
    num_row_tiles = B // imgs

    # Reshape-based pooling is a free view only when P is sublane aligned
    # for the elementwise dtype (8 rows/f32, 16 rows/bf16 per packed vreg).
    pool_sublane = 16 if elt_dtype == jnp.bfloat16 else 8
    use_reshape_pool = (P % pool_sublane == 0)

    operands = [patches, w1, b1, w2, b2]
    in_specs = [
        # patches: one row tile per grid row, same block for both branch
        # steps (DMA'd once per tile).
        pl.BlockSpec((tile_rows, din), lambda r, br: (r, 0)),
        # stacked weights/biases: constant block -> resident, never re-DMA'd.
        pl.BlockSpec((2, din, d), lambda r, br: (0, 0, 0)),
        pl.BlockSpec((2, 1, d), lambda r, br: (0, 0, 0)),
        pl.BlockSpec((2, d, dout_pad), lambda r, br: (0, 0, 0)),
        pl.BlockSpec((2, 1, dout_pad), lambda r, br: (0, 0, 0)),
    ]
    pool_bytes = 0
    if not use_reshape_pool:
        img_idx = jnp.arange(imgs)[:, None]
        row_idx = jnp.arange(tile_rows)[None, :]
        pool = (row_idx // P == img_idx).astype(elt_dtype)  # block-diag ones
        operands.append(pool)
        in_specs.append(pl.BlockSpec((imgs, tile_rows), lambda r, br: (0, 0)))
        pool_bytes = imgs * tile_rows * elt_bytes

    kernel = functools.partial(
        _teacher_student_kernel,
        imgs_per_tile=imgs, patches_per_image=P,
        elt_dtype=elt_dtype, use_reshape_pool=use_reshape_pool)

    # VMEM budget: resident stacked weights (counted double-buffered to be
    # safe) + double-buffered patch tile + f32 matmul result + elt temps +
    # output blocks + pool matrix.
    weight_bytes = 2 * (_nbytes(w1) + _nbytes(b1) + _nbytes(w2) + _nbytes(b2))
    needed = (weight_bytes
              + 2 * tile_rows * din * 2
              + tile_rows * d * (4 + 3 * elt_bytes)
              + 4 * imgs * dout_pad * 4
              + 2 * pool_bytes)
    vmem_limit = int(min(max(2 * needed, 32 << 20), int(0.8 * vmem_capacity)))

    cost = pl.CostEstimate(
        flops=2 * 2 * (n_rows * din * d + B * d * dout_pad),
        transcendentals=2 * n_rows * d,
        bytes_accessed=(_nbytes(patches) + _nbytes(w1) + _nbytes(b1)
                        + _nbytes(w2) + _nbytes(b2) + 2 * B * dout_pad * 4),
    )

    out = pl.pallas_call(
        kernel,
        out_shape=jax.ShapeDtypeStruct((2, B, dout_pad), jnp.float32),
        grid_spec=pltpu.PrefetchScalarGridSpec(
            num_scalar_prefetch=0,
            # rows outer (parallel -> split across TensorCores on v7x),
            # branch inner (arbitrary -> patches tile reused by both branches).
            grid=(num_row_tiles, 2),
            in_specs=in_specs,
            out_specs=pl.BlockSpec((None, imgs, dout_pad),
                                   lambda r, br: (br, r, 0)),
        ),
        compiler_params=pltpu.CompilerParams(
            dimension_semantics=("parallel", "arbitrary"),
            vmem_limit_bytes=vmem_limit,
        ),
        cost_estimate=cost,
    )(*operands)

    out = out[..., :dout]                 # drop lane padding
    return out[0], out[1]                 # (output_s, output_t)


# ------------------------------ reference ----------------------------------
def _reference_forward(x, params, patch):
    """Pure-JAX f32 reference of one backbone branch."""
    patches = _extract_patches(x, patch)
    h = patches @ params["w1"] + params["b1"]
    h = jax.nn.gelu(h, approximate=True)
    B = x.shape[0]
    P = patches.shape[0] // B
    pooled = h.reshape(B, P, -1).mean(axis=1)
    return pooled @ params["w2"] + params["b2"]


def init_params(key, din, d, dout):
    k1, k2 = jax.random.split(key)
    return {
        "w1": jax.random.normal(k1, (din, d), jnp.float32) * 0.02,
        "b1": jnp.zeros((1, d), jnp.float32),
        "w2": jax.random.normal(k2, (d, dout), jnp.float32) * 0.02,
        "b2": jnp.zeros((1, dout), jnp.float32),
    }


if __name__ == "__main__":
    B, C, H, W = 2, 4, 16, 16
    PATCH = 4
    DIN = C * PATCH * PATCH      # 64
    D = 128                      # embed dim
    DOUT = 32                    # head output dim

    key = jax.random.PRNGKey(0)
    kx, kp = jax.random.split(key)
    x = jax.random.normal(kx, (B, C, H, W), jnp.float32)

    student_params = init_params(kp, DIN, D, DOUT)
    # deepcopy semantics: teacher starts identical to the student.
    teacher_params = jax.tree_util.tree_map(lambda p: p.copy(), student_params)

    out_s, out_t = teacher_student_forward(x, student_params, teacher_params,
                                           patch=PATCH)
    jax.block_until_ready((out_s, out_t))

    assert out_s.shape == (B, DOUT) and out_t.shape == (B, DOUT)
    # Teacher is a deep copy of the student -> identical outputs initially.
    assert jnp.allclose(out_s, out_t, rtol=1e-5, atol=1e-6)
    # Match the f32 reference (bf16 matmul / elementwise -> loose tolerance).
    ref = _reference_forward(x, student_params, PATCH)
    assert jnp.allclose(out_s, ref, rtol=3e-2, atol=3e-2)

    # TODO(synk): update_teacher_weight (EMA) is a training-time op, not part
    # of the forward pass, so it is not implemented as a kernel here.
    print("KERNEL_OK")
</pallas_src>

<mosaic_0001>
module attributes {stable_mosaic.version = 11 : i64} {
  func.func @_teacher_student_kernel(%arg0: i32, %arg1: i32, %arg2: memref<32x64xbf16, #tpu.memory_space<vmem>>, %arg3: memref<2x64x128xbf16, #tpu.memory_space<vmem>>, %arg4: memref<2x1x128xf32, #tpu.memory_space<vmem>>, %arg5: memref<2x128x128xbf16, #tpu.memory_space<vmem>>, %arg6: memref<2x1x128xf32, #tpu.memory_space<vmem>>, %arg7: memref<1x2x128xf32, #tpu.memory_space<vmem>>) attributes {dimension_semantics = [#tpu.dimension_semantics<parallel>, #tpu.dimension_semantics<arbitrary>], iteration_bounds = array<i64: 1, 2>, scalar_prefetch = 0 : i64, scratch_operands = 0 : i64, tpu.core_type = #tpu.core_type<tc>, window_params = [{transform_indices = @transform_0, window_bounds = array<i64: 32, 64>}, {pipeline_mode = #tpu.pipeline_mode<synchronous>, transform_indices = @transform_1, window_bounds = array<i64: 2, 64, 128>}, {pipeline_mode = #tpu.pipeline_mode<synchronous>, transform_indices = @transform_2, window_bounds = array<i64: 2, 1, 128>}, {pipeline_mode = #tpu.pipeline_mode<synchronous>, transform_indices = @transform_3, window_bounds = array<i64: 2, 128, 128>}, {pipeline_mode = #tpu.pipeline_mode<synchronous>, transform_indices = @transform_4, window_bounds = array<i64: 2, 1, 128>}, {transform_indices = @transform_5, window_bounds = array<i64: 1, 2, 128>}]} {
    %0 = arith.index_cast %arg1 : i32 to index
    %c0 = arith.constant 0 : index
    %c0_0 = arith.constant 0 : index
    %1 = vector.load %arg3[%0, %c0, %c0_0] : memref<2x64x128xbf16, #tpu.memory_space<vmem>>, vector<1x64x128xbf16>
    %2 = vector.shape_cast %1 : vector<1x64x128xbf16> to vector<64x128xbf16>
    %3 = arith.index_cast %arg1 : i32 to index
    %c0_1 = arith.constant 0 : index
    %c0_2 = arith.constant 0 : index
    %4 = vector.load %arg4[%3, %c0_1, %c0_2] : memref<2x1x128xf32, #tpu.memory_space<vmem>>, vector<1x1x128xf32>
    %5 = vector.shape_cast %4 : vector<1x1x128xf32> to vector<1x128xf32>
    %6 = arith.index_cast %arg1 : i32 to index
    %c0_3 = arith.constant 0 : index
    %c0_4 = arith.constant 0 : index
    %7 = vector.load %arg5[%6, %c0_3, %c0_4] : memref<2x128x128xbf16, #tpu.memory_space<vmem>>, vector<1x128x128xbf16>
    %8 = vector.shape_cast %7 : vector<1x128x128xbf16> to vector<128x128xbf16>
    %9 = arith.index_cast %arg1 : i32 to index
    %c0_5 = arith.constant 0 : index
    %c0_6 = arith.constant 0 : index
    %10 = vector.load %arg6[%9, %c0_5, %c0_6] : memref<2x1x128xf32, #tpu.memory_space<vmem>>, vector<1x1x128xf32>
    %11 = vector.shape_cast %10 : vector<1x1x128xf32> to vector<1x128xf32>
    %c0_7 = arith.constant 0 : index
    %c0_8 = arith.constant 0 : index
    %12 = vector.load %arg2[%c0_7, %c0_8] : memref<32x64xbf16, #tpu.memory_space<vmem>>, vector<32x64xbf16>
    %cst = arith.constant dense<0.000000e+00> : vector<32x128xf32>
    %13 = tpu.matmul %12, %2, %cst {dimension_numbers = #tpu.dot_dimension_numbers<[1], [0], [0], [1], [0, 0, 1, 1], [], []>} : vector<32x64xbf16>, vector<64x128xbf16>, vector<32x128xf32> -> vector<32x128xf32>
    %14 = vector.broadcast %5 : vector<1x128xf32> to vector<32x128xf32>
    %15 = arith.addf %13, %14 : vector<32x128xf32>
    %16 = arith.mulf %15, %15 : vector<32x128xf32>
    %17 = arith.mulf %15, %16 : vector<32x128xf32>
    %cst_9 = arith.constant 4.471500e-02 : f32
    %18 = vector.broadcast %cst_9 : f32 to vector<32x128xf32>
    %19 = arith.mulf %18, %17 : vector<32x128xf32>
    %20 = arith.addf %15, %19 : vector<32x128xf32>
    %cst_10 = arith.constant 0.797884583 : f32
    %21 = vector.broadcast %cst_10 : f32 to vector<32x128xf32>
    %22 = arith.mulf %21, %20 : vector<32x128xf32>
    %23 = math.tanh %22 : vector<32x128xf32>
    %cst_11 = arith.constant 1.000000e+00 : f32
    %24 = vector.broadcast %cst_11 : f32 to vector<32x128xf32>
    %25 = arith.addf %24, %23 : vector<32x128xf32>
    %cst_12 = arith.constant 5.000000e-01 : f32
    %26 = vector.broadcast %cst_12 : f32 to vector<32x128xf32>
    %27 = arith.mulf %26, %25 : vector<32x128xf32>
    %28 = arith.mulf %15, %27 : vector<32x128xf32>
    %29 = vector.shape_cast %28 : vector<32x128xf32> to vector<2x16x128xf32>
    %cst_13 = arith.constant dense<0.000000e+00> : vector<2x128xf32>
    %30 = vector.multi_reduction <add>, %29, %cst_13 [1] : vector<2x16x128xf32> to vector<2x128xf32>
    %cst_14 = arith.constant 6.250000e-02 : f32
    %31 = vector.broadcast %cst_14 : f32 to vector<2x128xf32>
    %32 = arith.mulf %30, %31 : vector<2x128xf32>
    %33 = arith.truncf %32 : vector<2x128xf32> to vector<2x128xbf16>
    %cst_15 = arith.constant dense<0.000000e+00> : vector<2x128xf32>
    %34 = tpu.matmul %33, %8, %cst_15 {dimension_numbers = #tpu.dot_dimension_numbers<[1], [0], [0], [1], [0, 0, 1, 1], [], []>} : vector<2x128xbf16>, vector<128x128xbf16>, vector<2x128xf32> -> vector<2x128xf32>
    %35 = vector.broadcast %11 : vector<1x128xf32> to vector<2x128xf32>
    %36 = arith.addf %34, %35 : vector<2x128xf32>
    %c0_16 = arith.constant 0 : index
    %c0_17 = arith.constant 0 : index
    %c0_18 = arith.constant 0 : index
    %37 = vector.load %arg7[%c0_16, %c0_17, %c0_18] : memref<1x2x128xf32, #tpu.memory_space<vmem>>, vector<1x2x128xf32>
    %38 = vector.shape_cast %37 : vector<1x2x128xf32> to vector<2x128xf32>
    %39 = vector.shape_cast %36 : vector<2x128xf32> to vector<1x2x128xf32>
    tpu.vector_store %arg7[%c0_16, %c0_17, %c0_18], %39 {strides = array<i32>} : memref<1x2x128xf32, #tpu.memory_space<vmem>>, vector<1x2x128xf32>,
    return
  }
  func.func @transform_0(%arg0: i32, %arg1: i32) -> (i32, i32) {
    %c0_i32 = arith.constant 0 : i32
    %c0_i32_0 = arith.constant 0 : i32
    return %arg0, %c0_i32 : i32, i32
  }
  func.func @transform_1(%arg0: i32, %arg1: i32) -> (i32, i32, i32) {
    %c0_i32 = arith.constant 0 : i32
    %c0_i32_0 = arith.constant 0 : i32
    %c0_i32_1 = arith.constant 0 : i32
    %c0_i32_2 = arith.constant 0 : i32
    return %c0_i32, %c0_i32_0, %c0_i32_1 : i32, i32, i32
  }
  func.func @transform_2(%arg0: i32, %arg1: i32) -> (i32, i32, i32) {
    %c0_i32 = arith.constant 0 : i32
    %c0_i32_0 = arith.constant 0 : i32
    %c0_i32_1 = arith.constant 0 : i32
    %c0_i32_2 = arith.constant 0 : i32
    return %c0_i32, %c0_i32_0, %c0_i32_1 : i32, i32, i32
  }
  func.func @transform_3(%arg0: i32, %arg1: i32) -> (i32, i32, i32) {
    %c0_i32 = arith.constant 0 : i32
    %c0_i32_0 = arith.constant 0 : i32
    %c0_i32_1 = arith.constant 0 : i32
    %c0_i32_2 = arith.constant 0 : i32
    return %c0_i32, %c0_i32_0, %c0_i32_1 : i32, i32, i32
  }
  func.func @transform_4(%arg0: i32, %arg1: i32) -> (i32, i32, i32) {
    %c0_i32 = arith.constant 0 : i32
    %c0_i32_0 = arith.constant 0 : i32
    %c0_i32_1 = arith.constant 0 : i32
    %c0_i32_2 = arith.constant 0 : i32
    return %c0_i32, %c0_i32_0, %c0_i32_1 : i32, i32, i32
  }
  func.func @transform_5(%arg0: i32, %arg1: i32) -> (i32, i32, i32) {
    %c0_i32 = arith.constant 0 : i32
    %c0_i32_0 = arith.constant 0 : i32
    return %arg1, %arg0, %c0_i32 : i32, i32, i32
  }
}

</mosaic_0001>

<llo_original>
// kernel: teacher_student_forward.1
$region0: #{teacher_student_forward.1}
  #allocation0 [shape = 'u32[]', space=smem, size = 0x4, offset = 0x4, fixed_abs, tag = 'smem constant byte address 0x4 - core index']
  #allocation1 [shape = 'u32[72,128]{1,0:T(1,128)}', space=vmem, size = 0x9000, scoped, tag = 'internal scratch']
  %s0 = inlined_call_operand.vmem [shape: bf16[32,64], index: 0, kind: input, shape index: {}]
  %s1 = inlined_call_operand.vmem [shape: bf16[2,64,128], index: 1, kind: input, shape index: {}]
  %s2 = inlined_call_operand.vmem [shape: f32[2,1,128], index: 2, kind: input, shape index: {}]
  %s3 = inlined_call_operand.vmem [shape: bf16[2,128,128], index: 3, kind: input, shape index: {}]
  %s4 = inlined_call_operand.vmem [shape: f32[2,1,128], index: 4, kind: input, shape index: {}]
  %s5 = inlined_call_operand.vmem [shape: f32[2,2,128], index: 5, kind: output, shape index: {}]
  %s6 = sld [smem:[#allocation0]]
  $region53: #{teacher_student_forward.1} parent=0
    _
  %s8 = ssub.s32 1, %s6
  %s9 = scalar_select 0, %s8, %s6
  loop: start=0, step=1, limit=4
  $region2: #{teacher_student_forward.1} parent=0 // loop_pre_header
    _
  $region3: #{teacher_student_forward.1} parent=0 // loop_header
    %s11 = sphi 0, %s15
    %p12 = scmp.ge.s32.totalorder %s11, 4
    %s18 = sphi 0, %s30
    %s19 = sphi 0, %s26
    %s20 = sphi 0, %s18
    %s21 = sphi 0, %s19
    %s22 = sphi 0, %s20
    %s23 = sphi 0, %s21
    %s33 = sphi 0, %s35
    %s36 = sphi 0, %s33
    %s37 = sphi 0, %s36
    %s53 = sphi 0, %s37
    %s57 = sphi 0, %s57
    %s59 = sphi 0, %s57
    %s60 = sphi 0, %s59
    %s74 = sphi 0, %s60
    %s78 = sphi 0, %s78
    %s80 = sphi 0, %s78
    %s81 = sphi 0, %s80
    %s95 = sphi 0, %s81
    %s99 = sphi 0, %s99
    %s101 = sphi 0, %s99
    %s102 = sphi 0, %s101
    %s116 = sphi 0, %s102
    %s120 = sphi 0, %s120
    %s122 = sphi 0, %s120
    %s123 = sphi 0, %s122
    %s137 = sphi 0, %s123
    %s145 = sphi 0, %s147
    %s148 = sphi 0, %s145
    %s149 = sphi 0, %s148
    %s165 = sphi 0, %s149
  $region4: #{teacher_student_forward.1} parent=0 // loop_header_branch
    %14 = sbr.rel (%p12) target = $region8
  $region5: #{teacher_student_forward.1} parent=0 // loop_body
    %s16 = ssub.s32 %s11, 1
    %s17 = ssub.s32 %s11, 2
    %s24 = sadd.s32 1, %s19
    %p25 = scmp.ge.s32.totalorder %s24, 2
    %s26 = scalar_select %p25, 0, %s24
    %s27 = sadd.s32 1, %s18
    %s28 = scalar_select %p25, %s27, %s18
    %p29 = scmp.ge.s32.totalorder %s28, 1
    %s30 = scalar_select %p29, 0, %s28
    %s31 = ssub.s32 %s18, %s30
    %p32 = scmp.eq.s32.totalorder %s31, 0
    %s34 = sadd.s32 %s33, 1
    %s35 = scalar_select %p32, %s33, %s34
    %p38 = pneg %p32
    %p39 = scmp.eq.s32.totalorder %s11, 1
    %p40 = por %p38, %p39
    %p41 = scmp.ne.s32.totalorder %s33, %s36
    %p42 = scmp.eq.s32.totalorder %s11, 0
    %p43 = por %p41, %p42
    %p44 = scmp.ne.s32.totalorder %s33, %s36
    %p45 = scmp.eq.s32.totalorder %s16, 1
    %p46 = por %p44, %p45
    %p47 = scmp.ne.s32.totalorder %s36, %s37
    %p48 = scmp.eq.s32.totalorder %s16, 0
    %p49 = por %p47, %p48
    %p50 = scmp.ne.s32.totalorder %s36, %s37
    %p51 = scmp.eq.s32.totalorder %s17, 1
    %p52 = por %p50, %p51
    %p54 = scmp.ne.s32.totalorder %s37, %s53
    %p55 = scmp.eq.s32.totalorder %s17, 0
    %p56 = por %p54, %p55
    %s58 = sadd.s32 %s57, 1
    %p61 = scmp.eq.s32.totalorder %s11, 1
    %p62 = scmp.ne.s32.totalorder %s57, %s59
    %p63 = scmp.eq.s32.totalorder %s11, 0
    %p64 = por %p62, %p63
    %p65 = scmp.ne.s32.totalorder %s57, %s59
    %p66 = scmp.eq.s32.totalorder %s16, 1
    %p67 = por %p65, %p66
    %p68 = scmp.ne.s32.totalorder %s59, %s60
    %p69 = scmp.eq.s32.totalorder %s16, 0
    %p70 = por %p68, %p69
    %p71 = scmp.ne.s32.totalorder %s59, %s60
    %p72 = scmp.eq.s32.totalorder %s17, 1
    %p73 = por %p71, %p72
    %p75 = scmp.ne.s32.totalorder %s60, %s74
    %p76 = scmp.eq.s32.totalorder %s17, 0
    %p77 = por %p75, %p76
    %s79 = sadd.s32 %s78, 1
    %p82 = scmp.eq.s32.totalorder %s11, 1
    %p83 = scmp.ne.s32.totalorder %s78, %s80
    %p84 = scmp.eq.s32.totalorder %s11, 0
    %p85 = por %p83, %p84
    %p86 = scmp.ne.s32.totalorder %s78, %s80
    %p87 = scmp.eq.s32.totalorder %s16, 1
    %p88 = por %p86, %p87
    %p89 = scmp.ne.s32.totalorder %s80, %s81
    %p90 = scmp.eq.s32.totalorder %s16, 0
    %p91 = por %p89, %p90
    %p92 = scmp.ne.s32.totalorder %s80, %s81
    %p93 = scmp.eq.s32.totalorder %s17, 1
    %p94 = por %p92, %p93
    %p96 = scmp.ne.s32.totalorder %s81, %s95
    %p97 = scmp.eq.s32.totalorder %s17, 0
    %p98 = por %p96, %p97
    %s100 = sadd.s32 %s99, 1
    %p103 = scmp.eq.s32.totalorder %s11, 1
    %p104 = scmp.ne.s32.totalorder %s99, %s101
    %p105 = scmp.eq.s32.totalorder %s11, 0
    %p106 = por %p104, %p105
    %p107 = scmp.ne.s32.totalorder %s99, %s101
    %p108 = scmp.eq.s32.totalorder %s16, 1
    %p109 = por %p107, %p108
    %p110 = scmp.ne.s32.totalorder %s101, %s102
    %p111 = scmp.eq.s32.totalorder %s16, 0
    %p112 = por %p110, %p111
    %p113 = scmp.ne.s32.totalorder %s101, %s102
    %p114 = scmp.eq.s32.totalorder %s17, 1
    %p115 = por %p113, %p114
    %p117 = scmp.ne.s32.totalorder %s102, %s116
    %p118 = scmp.eq.s32.totalorder %s17, 0
    %p119 = por %p117, %p118
    %s121 = sadd.s32 %s120, 1
    %p124 = scmp.eq.s32.totalorder %s11, 1
    %p125 = scmp.ne.s32.totalorder %s120, %s122
    %p126 = scmp.eq.s32.totalorder %s11, 0
    %p127 = por %p125, %p126
    %p128 = scmp.ne.s32.totalorder %s120, %s122
    %p129 = scmp.eq.s32.totalorder %s16, 1
    %p130 = por %p128, %p129
    %p131 = scmp.ne.s32.totalorder %s122, %s123
    %p132 = scmp.eq.s32.totalorder %s16, 0
    %p133 = por %p131, %p132
    %p134 = scmp.ne.s32.totalorder %s122, %s123
    %p135 = scmp.eq.s32.totalorder %s17, 1
    %p136 = por %p134, %p135
    %p138 = scmp.ne.s32.totalorder %s123, %s137
    %p139 = scmp.eq.s32.totalorder %s17, 0
    %p140 = por %p138, %p139
    %s141 = ssub.s32 %s19, %s26
    %s142 = ssub.s32 %s18, %s30
    %s143 = sor.u32 %s141, %s142
    %p144 = scmp.eq.s32.totalorder %s143, 0
    %s146 = sadd.s32 %s145, 1
    %s147 = scalar_select %p144, %s145, %s146
    %p150 = pneg %p144
    %p151 = scmp.eq.s32.totalorder %s11, 1
    %p152 = por %p150, %p151
    %p153 = scmp.ne.s32.totalorder %s145, %s148
    %p154 = scmp.eq.s32.totalorder %s11, 0
    %p155 = por %p153, %p154
    %p156 = scmp.ne.s32.totalorder %s145, %s148
    %p157 = scmp.eq.s32.totalorder %s16, 1
    %p158 = por %p156, %p157
    %p159 = scmp.ne.s32.totalorder %s148, %s149
    %p160 = scmp.eq.s32.totalorder %s16, 0
    %p161 = por %p159, %p160
    %p162 = scmp.ne.s32.totalorder %s148, %s149
    %p163 = scmp.eq.s32.totalorder %s17, 1
    %p164 = por %p162, %p163
    %p166 = scmp.ne.s32.totalorder %s149, %s165
    %p167 = scmp.eq.s32.totalorder %s17, 0
    %p168 = por %p166, %p167
    %p169 = scmp.le.s32.totalorder 1, %s11
    %p170 = scmp.lt.s32.totalorder %s11, 3
    %p171 = pnand %p169, %p170
    %p172 = pneg %p171
    // Predicated region
    $region9: #{teacher_student_forward.1} parent=5 // pred_check
      _
    $region10: #{teacher_student_forward.1} parent=5 // pred_check_branch
      %174 = sbr.rel (%p171) target = $region12
    $region11: #{teacher_student_forward.1} parent=5 // pred_region
      %s175 = ssub.s32 %s11, 1
      // Predicated region
      $region13: #{teacher_student_forward.1} parent=11 // pred_check
        %p176 = pneg %p49
      $region14: #{teacher_student_forward.1} parent=11 // pred_check_branch
        %178 = sbr.rel (%p176) target = $region16
      $region15: #{teacher_student_forward.1} parent=11 // pred_region
        %s179 = smul.u32 4, %s20
        %p180 = scmp.lt.s32.totalorder %s179, 3
        %s181 = scalar_select %p180, %s179, 3
        %s182 = smul.addr %s181, 4
        %s183 = scalar_lea.vmem %s0, %s182
        %s184 = smul.u32 4, %s20
      $region16: #{teacher_student_forward.1} parent=11 // pred_fallthru
        _
      // Predicated region
      $region17: #{teacher_student_forward.1} parent=11 // pred_check
        %p185 = pneg %p70
      $region18: #{teacher_student_forward.1} parent=11 // pred_check_branch
        %187 = sbr.rel (%p185) target = $region20
      $region19: #{teacher_student_forward.1} parent=11 // pred_region
        _
      $region20: #{teacher_student_forward.1} parent=11 // pred_fallthru
        _
      // Predicated region
      $region21: #{teacher_student_forward.1} parent=11 // pred_check
        %p188 = pneg %p91
      $region22: #{teacher_student_forward.1} parent=11 // pred_check_branch
        %190 = sbr.rel (%p188) target = $region24
      $region23: #{teacher_student_forward.1} parent=11 // pred_region
        _
      $region24: #{teacher_student_forward.1} parent=11 // pred_fallthru
        _
      // Predicated region
      $region25: #{teacher_student_forward.1} parent=11 // pred_check
        %p191 = pneg %p112
      $region26: #{teacher_student_forward.1} parent=11 // pred_check_branch
        %193 = sbr.rel (%p191) target = $region28
      $region27: #{teacher_student_forward.1} parent=11 // pred_region
        _
      $region28: #{teacher_student_forward.1} parent=11 // pred_fallthru
        _
      // Predicated region
      $region29: #{teacher_student_forward.1} parent=11 // pred_check
        %p194 = pneg %p133
      $region30: #{teacher_student_forward.1} parent=11 // pred_check_branch
        %196 = sbr.rel (%p194) target = $region32
      $region31: #{teacher_student_forward.1} parent=11 // pred_region
        _
      $region32: #{teacher_student_forward.1} parent=11 // pred_fallthru
        _
    $region12: #{teacher_student_forward.1} parent=5 // pred_fallthru
      _
    %p197 = scmp.lt.s32.totalorder %s11, 2
    // Predicated region
    $region33: #{teacher_student_forward.1} parent=5 // pred_check
      %p198 = pneg %p197
    $region34: #{teacher_student_forward.1} parent=5 // pred_check_branch
      %200 = sbr.rel (%p198) target = $region36
    $region35: #{teacher_student_forward.1} parent=5 // pred_region
      _
    $region36: #{teacher_student_forward.1} parent=5 // pred_fallthru
      _
    %p201 = scmp.le.s32.totalorder 1, %s11
    %p202 = scmp.lt.s32.totalorder %s11, 3
    %p203 = pnand %p201, %p202
    %p204 = pneg %p203
    // Predicated region
    $region37: #{teacher_student_forward.1} parent=5 // pred_check
      _
    $region38: #{teacher_student_forward.1} parent=5 // pred_check_branch
      %206 = sbr.rel (%p203) target = $region40
    $region39: #{teacher_student_forward.1} parent=5 // pred_region
      %s207 = ssub.s32 %s11, 1
      %s208 = smul.u32 4, %s20
      %p209 = scmp.lt.s32.totalorder %s208, 3
      %s210 = scalar_select %p209, %s208, 3
      %s211 = smul.addr %s210, 4
      %s212 = scalar_lea.vmem %s0, %s211
      %p213 = pneg %p49
      %p214 = pneg %p46
      %p215 = pneg %p70
      %p216 = pneg %p67
      %p217 = pneg %p91
      %p218 = pneg %p88
      %p219 = pneg %p112
      %p220 = pneg %p109
      %p221 = pneg %p133
      %p222 = pneg %p130
      %p223 = pneg %p161
      %p224 = pneg %p158
      %p225 = scmp.lt.s32.totalorder %s21, 1
      %s226 = scalar_select %p225, %s21, 1
      %p227 = scmp.lt.s32.totalorder %s20, 0
      %s228 = scalar_select %p227, %s20, 0
      %s229 = sadd.s32 %s228, %s226
      %s230 = smul.addr %s229, 2
      %s231 = scalar_lea.vmem %s5, %s230
      %s232 = smul.u32 4, %s20
      %p233 = scmp.lt.s32.totalorder %s232, 3
      %s234 = scalar_select %p233, %s232, 3
      %s235 = smul.addr %s234, 4
      %s236 = scalar_lea.vmem %s0, %s235
      %s237 = smul.u32 4, %s20
      %p238 = scmp.lt.s32.totalorder %s21, 1
      %s239 = scalar_select %p238, %s21, 1
      %p240 = scmp.lt.s32.totalorder %s20, 0
      %s241 = scalar_select %p240, %s20, 0
      %s242 = sadd.s32 %s241, %s239
      %s243 = smul.addr %s242, 2
      %s244 = scalar_lea.vmem %s5, %s243
      %s246 = smul.u32 %s21, 8
      %s247 = smul.addr %s246, 4
      %s248 = scalar_lea.vmem %s1, %s247
      %v249 = vld [vmem:[%s248] sm:$0xf]
      %v250 = vld [vmem:[%s248 + $0x4] sm:$0xf]
      %v251 = vld [vmem:[%s248 + $0x8] sm:$0xf]
      %v252 = vld [vmem:[%s248 + $0xc] sm:$0xf]
      %v253 = vld [vmem:[%s248 + $0x10] sm:$0xf]
      %v254 = vld [vmem:[%s248 + $0x14] sm:$0xf]
      %v255 = vld [vmem:[%s248 + $0x18] sm:$0xf]
      %v256 = vld [vmem:[%s248 + $0x1c] sm:$0xf]
      %s257 = scalar_lea.vmem %s2, %s21
      %v258 = vld [vmem:[%s257] sm:$0x1]
      %s259 = smul.u32 %s21, 16
      %s260 = smul.addr %s259, 4
      %s261 = scalar_lea.vmem %s3, %s260
      %v262 = vld [vmem:[%s261] sm:$0xf]
      %v263 = vld [vmem:[%s261 + $0x4] sm:$0xf]
      %v264 = vld [vmem:[%s261 + $0x8] sm:$0xf]
      %v265 = vld [vmem:[%s261 + $0xc] sm:$0xf]
      %v266 = vld [vmem:[%s261 + $0x10] sm:$0xf]
      %v267 = vld [vmem:[%s261 + $0x14] sm:$0xf]
      %v268 = vld [vmem:[%s261 + $0x18] sm:$0xf]
      %v269 = vld [vmem:[%s261 + $0x1c] sm:$0xf]
      %v270 = vld [vmem:[%s261 + $0x20] sm:$0xf]
      %v271 = vld [vmem:[%s261 + $0x24] sm:$0xf]
      %v272 = vld [vmem:[%s261 + $0x28] sm:$0xf]
      %v273 = vld [vmem:[%s261 + $0x2c] sm:$0xf]
      %v274 = vld [vmem:[%s261 + $0x30] sm:$0xf]
      %v275 = vld [vmem:[%s261 + $0x34] sm:$0xf]
      %v276 = vld [vmem:[%s261 + $0x38] sm:$0xf]
      %v277 = vld [vmem:[%s261 + $0x3c] sm:$0xf]
      %s278 = scalar_lea.vmem %s4, %s21
      %v279 = vld [vmem:[%s278] sm:$0x1]
      %v280 = vld [vmem:[%s236] sm:$0xf]
      %v281 = vld [vmem:[%s236 + $0x4] sm:$0xf]
      %v282 = vld [vmem:[%s236 + $0x8] sm:$0xf]
      %v283 = vld [vmem:[%s236 + $0xc] sm:$0xf]
      %v285 = vperm.slane %v258, 0
      %v291 = vunpack.c.l.b16 %v280
      %v292 = vunpack.c.l.b16 %v281
      %v293 = vunpack.c.l.b16 %v282
      %v294 = vunpack.c.l.b16 %v283
      %v295 = vpack.c.b16 %v292, %v291
      %v296 = vpack.c.b16 %v294, %v293
      %v305 = vunpack.c.l.b16 %v249
      %v306 = vunpack.c.l.b16 %v250
      %v307 = vunpack.c.l.b16 %v251
      %v308 = vunpack.c.l.b16 %v252
      %v309 = vunpack.c.l.b16 %v253
      %v310 = vunpack.c.l.b16 %v254
      %v311 = vunpack.c.l.b16 %v255
      %v312 = vunpack.c.l.b16 %v256
      %v313 = vpack.c.b16 %v306, %v305
      %v314 = vpack.c.b16 %v308, %v307
      %v315 = vpack.c.b16 %v310, %v309
      %v316 = vpack.c.b16 %v312, %v311
      %vm321 = vcmask 523264
      %v323 = vsel %vm321, %v295, 0
      %v326 = vsel %vm321, %v296, 0
      %328 = vmatpush.bf16.msra.mxu0 0
      %329 = vmatpush.bf16.msra.mxu0 0
      %330 = vmatpush.bf16.msra.mxu0 0
      %331 = vmatpush.bf16.msra.mxu0 0
      %332 = vmatpush.bf16.msra.mxu0 %v316
      %333 = vmatpush.bf16.msra.mxu0 %v315
      %334 = vmatpush.bf16.msra.mxu0 %v314
      %335 = vmatpush.bf16.msra.mxu0 %v313
      %336 = vmatmul.bf16.gmra.mxu0 %v323
      %v337 = vpop.f32.mrf.mxu0
      %v338 = vadd.f32 %v285, %v337
      %v339 = vpop.f32.mrf.mxu0
      %v340 = vadd.f32 %v285, %v339
      %341 = vmatmul.bf16.gmra.mxu0 %v326
      %v342 = vpop.f32.mrf.mxu0
      %v343 = vadd.f32 %v285, %v342
      %v344 = vpop.f32.mrf.mxu0
      %v345 = vadd.f32 %v285, %v344
      %346 = vdwg.mxu0
      %v347 = vmul.f32 %v338, %v338
      %v348 = vmul.f32 %v340, %v340
      %v349 = vmul.f32 %v343, %v343
      %v350 = vmul.f32 %v345, %v345
      %v351 = vmul.f32 %v338, %v347
      %v352 = vmul.f32 %v340, %v348
      %v353 = vmul.f32 %v343, %v349
      %v354 = vmul.f32 %v345, %v350
      %v355 = vmul.f32 %v351, 0.044715
      %v356 = vmul.f32 %v352, 0.044715
      %v357 = vmul.f32 %v353, 0.044715
      %v358 = vmul.f32 %v354, 0.044715
      %v359 = vadd.f32 %v338, %v355
      %v360 = vadd.f32 %v340, %v356
      %v361 = vadd.f32 %v343, %v357
      %v362 = vadd.f32 %v345, %v358
      %v363 = vmul.f32 %v359, 0.7978846
      %v364 = vmul.f32 %v360, 0.7978846
      %v365 = vmul.f32 %v361, 0.7978846
      %v366 = vmul.f32 %v362, 0.7978846
      %v367 = vtanh.pop %v363
      %v368 = vtanh.pop %v364
      %v369 = vtanh.pop %v365
      %v370 = vtanh.pop %v366
      %v371 = vadd.f32 %v367, 1.0
      %v372 = vadd.f32 %v368, 1.0
      %v373 = vadd.f32 %v369, 1.0
      %v374 = vadd.f32 %v370, 1.0
      %v375 = vmul.f32 %v371, 0.5
      %v376 = vmul.f32 %v372, 0.5
      %v377 = vmul.f32 %v373, 0.5
      %v378 = vmul.f32 %v374, 0.5
      %v379 = vmul.f32 %v338, %v375
      %v380 = vmul.f32 %v340, %v376
      %v381 = vmul.f32 %v343, %v377
      %v382 = vmul.f32 %v345, %v378
      %v383 = vadd.f32 %v379, %v380
      %v384 = vrot.slane %v383, 4
      %v385 = vadd.f32 %v383, %v384
      %v386 = vrot.slane %v385, 2
      %v387 = vadd.f32 %v385, %v386
      %v388 = vrot.slane %v387, 1
      %v389 = vadd.f32 %v387, %v388
      %v390 = vadd.f32 %v381, %v382
      %v391 = vrot.slane %v390, 4
      %v392 = vadd.f32 %v390, %v391
      %v393 = vrot.slane %v392, 2
      %v394 = vadd.f32 %v392, %v393
      %v395 = vrot.slane %v394, 1
      %v396 = vadd.f32 %v394, %v395
      %v397 = vmul.f32 %v389, 0.0625
      %v398 = vmul.f32 %v396, 0.0625
      %v399 = vpack.c.bf16 %v397, %v397
      %v400 = vpack.c.bf16 %v398, %v398
      %v402 = vperm.slane %v279, 0
      %v406 = vunpack.c.l.b16 %v399
      %v407 = vunpack.c.l.b16 %v400
      %vm408 = vcmask 1041409
      %v409 = vsel %vm408, %v407, %v406
      %v410 = vpack.c.b16 %v409, %v409
      %v428 = vunpack.c.l.b16 %v262
      %v429 = vunpack.c.l.b16 %v263
      %v430 = vunpack.c.l.b16 %v264
      %v431 = vunpack.c.l.b16 %v265
      %v432 = vunpack.c.l.b16 %v266
      %v433 = vunpack.c.l.b16 %v267
      %v434 = vunpack.c.l.b16 %v268
      %v435 = vunpack.c.l.b16 %v269
      %v436 = vunpack.c.l.b16 %v270
      %v437 = vunpack.c.l.b16 %v271
      %v438 = vunpack.c.l.b16 %v272
      %v439 = vunpack.c.l.b16 %v273
      %v440 = vunpack.c.l.b16 %v274
      %v441 = vunpack.c.l.b16 %v275
      %v442 = vunpack.c.l.b16 %v276
      %v443 = vunpack.c.l.b16 %v277
      %v444 = vpack.c.b16 %v429, %v428
      %v445 = vpack.c.b16 %v431, %v430
      %v446 = vpack.c.b16 %v433, %v432
      %v447 = vpack.c.b16 %v435, %v434
      %v448 = vpack.c.b16 %v437, %v436
      %v449 = vpack.c.b16 %v439, %v438
      %v450 = vpack.c.b16 %v441, %v440
      %v451 = vpack.c.b16 %v443, %v442
      %460 = vmatpush.bf16.msra.mxu0 %v451
      %461 = vmatpush.bf16.msra.mxu0 %v450
      %462 = vmatpush.bf16.msra.mxu0 %v449
      %463 = vmatpush.bf16.msra.mxu0 %v448
      %464 = vmatpush.bf16.msra.mxu0 %v447
      %465 = vmatpush.bf16.msra.mxu0 %v446
      %466 = vmatpush.bf16.msra.mxu0 %v445
      %467 = vmatpush.bf16.msra.mxu0 %v444
      %468 = vmatmul.bf16.gmra.mxu0 %v410
      %v469 = vpop.f32.mrf.mxu0
      %v470 = vadd.f32 %v402, %v469
      %v471 = vpop.f32.mrf.mxu0
      %472 = vdwg.mxu0
      %473 = vst [vmem:[%s244] sm:$0x3] %v470
      %p474 = scmp.lt.s32.totalorder %s21, 1
      %s475 = scalar_select %p474, %s21, 1
      %p476 = scmp.lt.s32.totalorder %s20, 0
      %s477 = scalar_select %p476, %s20, 0
      %s478 = sadd.s32 %s477, %s475
      %s479 = smul.addr %s478, 2
      %s480 = scalar_lea.vmem %s5, %s479
      // Predicated region
      $region41: #{teacher_student_forward.1} parent=39 // pred_check
        %p481 = pneg %p158
      $region42: #{teacher_student_forward.1} parent=39 // pred_check_branch
        %483 = sbr.rel (%p481) target = $region44
      $region43: #{teacher_student_forward.1} parent=39 // pred_region
        _
      $region44: #{teacher_student_forward.1} parent=39 // pred_fallthru
        _
    $region40: #{teacher_student_forward.1} parent=5 // pred_fallthru
      _
    %p484 = scmp.le.s32.totalorder 2, %s11
    // Predicated region
    $region45: #{teacher_student_forward.1} parent=5 // pred_check
      %p485 = pneg %p484
    $region46: #{teacher_student_forward.1} parent=5 // pred_check_branch
      %487 = sbr.rel (%p485) target = $region48
    $region47: #{teacher_student_forward.1} parent=5 // pred_region
      %s488 = ssub.s32 %s11, 2
      // Predicated region
      $region49: #{teacher_student_forward.1} parent=47 // pred_check
        %p489 = pneg %p164
      $region50: #{teacher_student_forward.1} parent=47 // pred_check_branch
        %491 = sbr.rel (%p489) target = $region52
      $region51: #{teacher_student_forward.1} parent=47 // pred_region
        %p492 = scmp.lt.s32.totalorder %s23, 1
        %s493 = scalar_select %p492, %s23, 1
        %p494 = scmp.lt.s32.totalorder %s22, 0
        %s495 = scalar_select %p494, %s22, 0
        %s496 = sadd.s32 %s495, %s493
        %s497 = smul.addr %s496, 2
        %s498 = scalar_lea.vmem %s5, %s497
      $region52: #{teacher_student_forward.1} parent=47 // pred_fallthru
        _
    $region48: #{teacher_student_forward.1} parent=5 // pred_fallthru
      _
  $region6: #{teacher_student_forward.1} parent=0 // loop_footer
    %s15 = sadd.s32 1, %s11
  $region7: #{teacher_student_forward.1} parent=0 // loop_footer_branch
    %10 = sbr.rel target = $region3
  $region8: #{teacher_student_forward.1} parent=0 // loop_exit
    _

</llo_original>
